<compile_context>
chip_gen: v6e
topology: v6e:2x2x1
jax: 0.10.0
libtpu: 0.0.40
codegen_flags: <defaults>
</compile_context>

<pallas_src>
import jax
import jax.numpy as jnp
from jax.experimental import pallas as pl
from jax.experimental.pallas import tpu as pltpu


def _sigmoid(v):
    # EUP-friendly, numerically stable sigmoid: 0.5 * (1 + tanh(v / 2)).
    return 0.5 * (jnp.tanh(0.5 * v) + 1.0)


def synthesis_kernel(x_ref, wconv_ref, convb_ref, fcw_ref, fcb_ref, o_ref):
    # x_ref:     (TM, 3*L)    VMEM  rows = samples, lanes = flattened (3, L)
    # wconv_ref: (3*L, L-2)   VMEM  banded conv weights (same dtype as x)
    # convb_ref: (1, 1)       SMEM  scalar
    # fcw_ref:   (1, L-2)     VMEM  broadcast row for the FC multiply
    # fcb_ref:   (1, 1)       SMEM  scalar
    # o_ref:     (TM, 1)      VMEM

    # Valid 3x3 conv (1 in / 1 out channel, height 3 -> height 1) expressed as
    # a single MXU matmul against the precomputed banded weight matrix.
    acc = jnp.dot(x_ref[...], wconv_ref[...],
                  preferred_element_type=jnp.float32)         # (TM, L-2) f32
    acc = acc + convb_ref[0, 0]

    s = _sigmoid(acc)                                         # (TM, L-2)

    # FC layer: VPU multiply + XLU lane reduction (single useful output column
    # -> MXU would only add push/drain latency).
    y = jnp.sum(s * fcw_ref[...], axis=-1, keepdims=True)     # (TM, 1)
    o_ref[...] = _sigmoid(y + fcb_ref[0, 0])


def _round_up(v, m):
    return ((v + m - 1) // m) * m


def _banded_conv_matrix(conv_w33, L):
    """Build W_conv (3L, L-2) with W_conv[i*L + j + w, w] = conv_w[i, j]."""
    Wout = L - 2
    w = jnp.zeros((3 * L, Wout), jnp.float32)
    cols = jnp.arange(Wout)
    for i in range(3):
        for j in range(3):
            w = w.at[i * L + j + cols, cols].set(conv_w33[i, j])
    return w


def synthesis_net_forward(x_nchw, conv_w, conv_b, fc_w, fc_b, *,
                          block_rows=4096, use_bf16=False):
    """x_nchw: (N, 1, 3, L) float32. Returns (N, 1) float32."""
    N, C, H, L = x_nchw.shape
    assert C == 1 and H == 3, "synthesisNet expects (N, 1, 3, pathLength) inputs"
    Wout = L - 2

    # bf16 only feeds the MXU matmul (x and W_conv); sigmoid/FC stay f32.
    in_dtype = jnp.bfloat16 if use_bf16 else jnp.float32

    # Flatten the (1, 3, L) image dims onto the lane axis (zero-copy reshape).
    x = x_nchw.reshape(N, 3 * L).astype(in_dtype)

    # Batch tile: multiple of 8 (sublane granule).  For mid-size batches cap
    # TM so the grid has >= 2 steps (v7x megacore); for big batches cap at
    # block_rows so double-buffered blocks stay a few MiB.
    block_rows = max(8, (block_rows // 8) * 8)
    N8 = _round_up(N, 8)
    if N8 <= 8:
        TM = 8
    else:
        TM = min(block_rows, max(8, _round_up(pl.cdiv(N, 2), 8)))
    G = pl.cdiv(N, TM)
    Npad = G * TM
    if Npad != N:
        x = jnp.pad(x, ((0, Npad - N), (0, 0)))

    wconv = _banded_conv_matrix(
        conv_w.reshape(3, 3).astype(jnp.float32), L).astype(in_dtype)  # (3L, Wout)
    convb = conv_b.reshape(1, 1).astype(jnp.float32)                   # (1, 1) SMEM
    fcw = fc_w.reshape(1, Wout).astype(jnp.float32)                    # (1, Wout)
    fcb = fc_b.reshape(1, 1).astype(jnp.float32)                       # (1, 1) SMEM

    out = pl.pallas_call(
        synthesis_kernel,
        out_shape=jax.ShapeDtypeStruct((Npad, 1), jnp.float32),
        grid=(G,),
        in_specs=[
            pl.BlockSpec((TM, 3 * L), lambda i: (i, 0)),           # x tile
            pl.BlockSpec((3 * L, Wout), lambda i: (0, 0)),         # banded conv w
            pl.BlockSpec(memory_space=pltpu.MemorySpace.SMEM),     # conv bias
            pl.BlockSpec((1, Wout), lambda i: (0, 0)),             # fc w row
            pl.BlockSpec(memory_space=pltpu.MemorySpace.SMEM),     # fc bias
        ],
        out_specs=pl.BlockSpec((TM, 1), lambda i: (i, 0)),
        compiler_params=pltpu.CompilerParams(
            dimension_semantics=("parallel",),       # megacore split on v7x
            vmem_limit_bytes=32 * 1024 * 1024,
        ),
    )(x, wconv, convb, fcw, fcb)

    return out[:N]


def _reference_forward(x_nchw, conv_w, conv_b, fc_w, fc_b):
    """Pure-JAX reference of the PyTorch forward."""
    N, _, H, L = x_nchw.shape
    Wout = L - 2
    x = x_nchw[:, 0].astype(jnp.float32)                        # (N, 3, L)
    acc = jnp.full((N, Wout), conv_b[0], jnp.float32)
    for i in range(3):
        for j in range(3):
            acc = acc + x[:, i, j:j + Wout] * conv_w[0, 0, i, j]
    s = jax.nn.sigmoid(acc)
    y = jnp.sum(s * fc_w.reshape(1, Wout), axis=-1, keepdims=True) + fc_b[0]
    return jax.nn.sigmoid(y)


if __name__ == "__main__":
    path_length = 40              # default pathLength of the module

    key = jax.random.PRNGKey(0)
    kcw, kcb, kfw, kfb, kx1, kx2, kx3 = jax.random.split(key, 7)

    # Parameter shapes match nn.Conv2d(1,1,3) / nn.Linear(pathLength-2, 1);
    # uniform(-b, b) like PyTorch's default init.
    conv_bound = 1.0 / (1 * 3 * 3) ** 0.5
    fc_bound = 1.0 / (path_length - 2) ** 0.5
    conv_w = jax.random.uniform(kcw, (1, 1, 3, 3), jnp.float32,
                                -conv_bound, conv_bound)
    conv_b = jax.random.uniform(kcb, (1,), jnp.float32, -conv_bound, conv_bound)
    fc_w = jax.random.uniform(kfw, (1, path_length - 2), jnp.float32,
                              -fc_bound, fc_bound)
    fc_b = jax.random.uniform(kfb, (1,), jnp.float32, -fc_bound, fc_bound)

    # Case 1: the module's nominal tiny batch (single grid step, f32).
    x1 = jax.random.normal(kx1, (2, 1, 3, path_length), jnp.float32)
    out1 = jax.block_until_ready(
        synthesis_net_forward(x1, conv_w, conv_b, fc_w, fc_b))
    ref1 = _reference_forward(x1, conv_w, conv_b, fc_w, fc_b)
    assert out1.shape == (2, 1)
    # 1e-4 absorbs tanh-vs-logistic transcendental differences and MXU f32
    # accumulation-order differences while still catching layout/weight bugs.
    assert jnp.allclose(out1, ref1, atol=1e-4), float(jnp.max(jnp.abs(out1 - ref1)))

    # Case 2: ragged batch exercising the multi-step parallel grid and the
    # tail-padding path (N=37, block_rows=16 -> TM=16, 3 grid steps).
    x2 = jax.random.normal(kx2, (37, 1, 3, path_length), jnp.float32)
    out2 = jax.block_until_ready(
        synthesis_net_forward(x2, conv_w, conv_b, fc_w, fc_b, block_rows=16))
    ref2 = _reference_forward(x2, conv_w, conv_b, fc_w, fc_b)
    assert out2.shape == (37, 1)
    assert jnp.allclose(out2, ref2, atol=1e-4), float(jnp.max(jnp.abs(out2 - ref2)))

    # Case 3: default large-block path with the two-step split (N=100 ->
    # TM=56, G=2) and the optional bf16 MXU input path (looser tolerance).
    x3 = jax.random.normal(kx3, (100, 1, 3, path_length), jnp.float32)
    out3 = jax.block_until_ready(
        synthesis_net_forward(x3, conv_w, conv_b, fc_w, fc_b, use_bf16=True))
    ref3 = _reference_forward(x3, conv_w, conv_b, fc_w, fc_b)
    assert out3.shape == (100, 1)
    assert jnp.allclose(out3, ref3, atol=1e-2), float(jnp.max(jnp.abs(out3 - ref3)))

    print("KERNEL_OK")
</pallas_src>

<mosaic_0001>
module attributes {stable_mosaic.version = 11 : i64} {
  func.func @synthesis_kernel(%arg0: i32, %arg1: memref<8x120xf32, #tpu.memory_space<vmem>>, %arg2: memref<120x38xf32, #tpu.memory_space<vmem>>, %arg3: memref<1x1xf32, #tpu.memory_space<smem>>, %arg4: memref<1x38xf32, #tpu.memory_space<vmem>>, %arg5: memref<1x1xf32, #tpu.memory_space<smem>>, %arg6: memref<8x1xf32, #tpu.memory_space<vmem>>) attributes {dimension_semantics = [#tpu.dimension_semantics<parallel>], iteration_bounds = array<i64: 1>, scalar_prefetch = 0 : i64, scratch_operands = 0 : i64, tpu.core_type = #tpu.core_type<tc>, window_params = [{transform_indices = @transform_0, window_bounds = array<i64: 8, 120>}, {pipeline_mode = #tpu.pipeline_mode<synchronous>, transform_indices = @transform_1, window_bounds = array<i64: 120, 38>}, {transform_indices = @transform_2, window_bounds = array<i64: 1, 1>}, {pipeline_mode = #tpu.pipeline_mode<synchronous>, transform_indices = @transform_3, window_bounds = array<i64: 1, 38>}, {transform_indices = @transform_4, window_bounds = array<i64: 1, 1>}, {transform_indices = @transform_5, window_bounds = array<i64: 8, 1>}]} {
    %c0 = arith.constant 0 : index
    %c0_0 = arith.constant 0 : index
    %0 = vector.load %arg1[%c0, %c0_0] : memref<8x120xf32, #tpu.memory_space<vmem>>, vector<8x120xf32>
    %c0_1 = arith.constant 0 : index
    %c0_2 = arith.constant 0 : index
    %1 = vector.load %arg2[%c0_1, %c0_2] : memref<120x38xf32, #tpu.memory_space<vmem>>, vector<120x38xf32>
    %cst = arith.constant dense<0.000000e+00> : vector<8x38xf32>
    %2 = tpu.matmul %0, %1, %cst {dimension_numbers = #tpu.dot_dimension_numbers<[1], [0], [0], [1], [0, 0, 1, 1], [], []>} : vector<8x120xf32>, vector<120x38xf32>, vector<8x38xf32> -> vector<8x38xf32>
    %c0_3 = arith.constant 0 : index
    %c0_4 = arith.constant 0 : index
    %3 = memref.load %arg3[%c0_3, %c0_4] : memref<1x1xf32, #tpu.memory_space<smem>>
    %4 = vector.broadcast %3 : f32 to vector<8x38xf32>
    %5 = arith.addf %2, %4 : vector<8x38xf32>
    %cst_5 = arith.constant 5.000000e-01 : f32
    %6 = vector.broadcast %cst_5 : f32 to vector<8x38xf32>
    %7 = arith.mulf %6, %5 : vector<8x38xf32>
    %8 = math.tanh %7 : vector<8x38xf32>
    %cst_6 = arith.constant 1.000000e+00 : f32
    %9 = vector.broadcast %cst_6 : f32 to vector<8x38xf32>
    %10 = arith.addf %8, %9 : vector<8x38xf32>
    %cst_7 = arith.constant 5.000000e-01 : f32
    %11 = vector.broadcast %cst_7 : f32 to vector<8x38xf32>
    %12 = arith.mulf %11, %10 : vector<8x38xf32>
    %c0_8 = arith.constant 0 : index
    %c0_9 = arith.constant 0 : index
    %13 = vector.load %arg4[%c0_8, %c0_9] : memref<1x38xf32, #tpu.memory_space<vmem>>, vector<1x38xf32>
    %14 = vector.broadcast %13 : vector<1x38xf32> to vector<8x38xf32>
    %15 = arith.mulf %12, %14 : vector<8x38xf32>
    %cst_10 = arith.constant dense<0.000000e+00> : vector<8xf32>
    %16 = vector.multi_reduction <add>, %15, %cst_10 [1] : vector<8x38xf32> to vector<8xf32>
    %17 = vector.shape_cast %16 : vector<8xf32> to vector<8x1xf32>
    %c0_11 = arith.constant 0 : index
    %c0_12 = arith.constant 0 : index
    %18 = memref.load %arg5[%c0_11, %c0_12] : memref<1x1xf32, #tpu.memory_space<smem>>
    %19 = vector.broadcast %18 : f32 to vector<8x1xf32>
    %20 = arith.addf %17, %19 : vector<8x1xf32>
    %cst_13 = arith.constant 5.000000e-01 : f32
    %21 = vector.broadcast %cst_13 : f32 to vector<8x1xf32>
    %22 = arith.mulf %21, %20 : vector<8x1xf32>
    %23 = math.tanh %22 : vector<8x1xf32>
    %cst_14 = arith.constant 1.000000e+00 : f32
    %24 = vector.broadcast %cst_14 : f32 to vector<8x1xf32>
    %25 = arith.addf %23, %24 : vector<8x1xf32>
    %cst_15 = arith.constant 5.000000e-01 : f32
    %26 = vector.broadcast %cst_15 : f32 to vector<8x1xf32>
    %27 = arith.mulf %26, %25 : vector<8x1xf32>
    %c0_16 = arith.constant 0 : index
    %c0_17 = arith.constant 0 : index
    %28 = vector.load %arg6[%c0_16, %c0_17] : memref<8x1xf32, #tpu.memory_space<vmem>>, vector<8x1xf32>
    tpu.vector_store %arg6[%c0_16, %c0_17], %27 {strides = array<i32>} : memref<8x1xf32, #tpu.memory_space<vmem>>, vector<8x1xf32>,
    return
  }
  func.func @transform_0(%arg0: i32) -> (i32, i32) {
    %c0_i32 = arith.constant 0 : i32
    %c0_i32_0 = arith.constant 0 : i32
    return %arg0, %c0_i32 : i32, i32
  }
  func.func @transform_1(%arg0: i32) -> (i32, i32) {
    %c0_i32 = arith.constant 0 : i32
    %c0_i32_0 = arith.constant 0 : i32
    %c0_i32_1 = arith.constant 0 : i32
    return %c0_i32, %c0_i32_0 : i32, i32
  }
  func.func @transform_2(%arg0: i32) -> (i32, i32) {
    %c0_i32 = arith.constant 0 : i32
    %c0_i32_0 = arith.constant 0 : i32
    %c0_i32_1 = arith.constant 0 : i32
    return %c0_i32, %c0_i32_0 : i32, i32
  }
  func.func @transform_3(%arg0: i32) -> (i32, i32) {
    %c0_i32 = arith.constant 0 : i32
    %c0_i32_0 = arith.constant 0 : i32
    %c0_i32_1 = arith.constant 0 : i32
    return %c0_i32, %c0_i32_0 : i32, i32
  }
  func.func @transform_4(%arg0: i32) -> (i32, i32) {
    %c0_i32 = arith.constant 0 : i32
    %c0_i32_0 = arith.constant 0 : i32
    %c0_i32_1 = arith.constant 0 : i32
    return %c0_i32, %c0_i32_0 : i32, i32
  }
  func.func @transform_5(%arg0: i32) -> (i32, i32) {
    %c0_i32 = arith.constant 0 : i32
    %c0_i32_0 = arith.constant 0 : i32
    return %arg0, %c0_i32 : i32, i32
  }
}

</mosaic_0001>

<llo_original>
// kernel: tpu_custom_call.1
$region0: #{tpu_custom_call.1}
  #allocation0 [shape = 'u32[]', space=smem, size = 0x4, offset = 0x4, fixed_abs, tag = 'smem constant byte address 0x4 - core index']
  #allocation1 [shape = 'u32[144,128]{1,0:T(1,128)}', space=vmem, size = 0x12000, scoped, tag = 'internal scratch']
  #allocation2 [shape = 'f32[1,1]{1,0:T(1,128)S(6)}', space=smem, size = 0x200, scoped, tag = 'scoped memory for tpu_custom_call.1']
  #allocation3 [shape = 'f32[1,1]{1,0:T(1,128)S(6)}', space=smem, size = 0x200, scoped, tag = 'scoped memory for tpu_custom_call.1']
  %s0 = inlined_call_operand.vmem [shape: f32[8,120], index: 0, kind: input, shape index: {}]
  %s1 = inlined_call_operand.vmem [shape: f32[120,38], index: 1, kind: input, shape index: {}]
  %s2 = inlined_call_operand.<no memory space> [shape: f32[1,1], index: 2, kind: input, shape index: {}]
  %s3 = inlined_call_operand.vmem [shape: f32[1,38], index: 3, kind: input, shape index: {}]
  %s4 = inlined_call_operand.<no memory space> [shape: f32[1,1], index: 4, kind: input, shape index: {}]
  %s5 = inlined_call_operand.vmem [shape: f32[8,1], index: 5, kind: output, shape index: {}]
  %s6 = sld [smem:[#allocation0]]
  $region30: #{tpu_custom_call.1} parent=0
    _
  %s8 = ssub.s32 1, %s6
  %s9 = scalar_select 0, %s8, %s6
  %10 = sst [smem:[#allocation2]] %s2
  %11 = sst [smem:[#allocation3]] %s4
  // Predicated region
  $region2: #{tpu_custom_call.1} parent=0 // pred_check
    _
  $region3: #{tpu_custom_call.1} parent=0 // pred_check_branch
    %13 = sbr.rel (0) target = $region5
  $region4: #{tpu_custom_call.1} parent=0 // pred_region
    _
  $region5: #{tpu_custom_call.1} parent=0 // pred_fallthru
    _
  // Predicated region
  $region6: #{tpu_custom_call.1} parent=0 // pred_check
    _
  $region7: #{tpu_custom_call.1} parent=0 // pred_check_branch
    %15 = sbr.rel (0) target = $region9
  $region8: #{tpu_custom_call.1} parent=0 // pred_region
    _
  $region9: #{tpu_custom_call.1} parent=0 // pred_fallthru
    _
  // Predicated region
  $region10: #{tpu_custom_call.1} parent=0 // pred_check
    _
  $region11: #{tpu_custom_call.1} parent=0 // pred_check_branch
    %17 = sbr.rel (0) target = $region13
  $region12: #{tpu_custom_call.1} parent=0 // pred_region
    _
  $region13: #{tpu_custom_call.1} parent=0 // pred_fallthru
    _
  // Predicated region
  $region14: #{tpu_custom_call.1} parent=0 // pred_check
    _
  $region15: #{tpu_custom_call.1} parent=0 // pred_check_branch
    %19 = sbr.rel (0) target = $region17
  $region16: #{tpu_custom_call.1} parent=0 // pred_region
    _
  $region17: #{tpu_custom_call.1} parent=0 // pred_fallthru
    _
  // Predicated region
  $region18: #{tpu_custom_call.1} parent=0 // pred_check
    _
  $region19: #{tpu_custom_call.1} parent=0 // pred_check_branch
    %21 = sbr.rel (0) target = $region21
  $region20: #{tpu_custom_call.1} parent=0 // pred_region
    _
  $region21: #{tpu_custom_call.1} parent=0 // pred_fallthru
    _
  %v22 = vld [vmem:[%s0] sm:$0xff]
  %v23 = vld [vmem:[%s1] sm:$0xff]
  %v24 = vld [vmem:[%s1 + $0x8] sm:$0xff]
  %v25 = vld [vmem:[%s1 + $0x10] sm:$0xff]
  %v26 = vld [vmem:[%s1 + $0x18] sm:$0xff]
  %v27 = vld [vmem:[%s1 + $0x20] sm:$0xff]
  %v28 = vld [vmem:[%s1 + $0x28] sm:$0xff]
  %v29 = vld [vmem:[%s1 + $0x30] sm:$0xff]
  %v30 = vld [vmem:[%s1 + $0x38] sm:$0xff]
  %v31 = vld [vmem:[%s1 + $0x40] sm:$0xff]
  %v32 = vld [vmem:[%s1 + $0x48] sm:$0xff]
  %v33 = vld [vmem:[%s1 + $0x50] sm:$0xff]
  %v34 = vld [vmem:[%s1 + $0x58] sm:$0xff]
  %v35 = vld [vmem:[%s1 + $0x60] sm:$0xff]
  %v36 = vld [vmem:[%s1 + $0x68] sm:$0xff]
  %v37 = vld [vmem:[%s1 + $0x70] sm:$0xff]
  %s38 = sld [smem:[#allocation2]]
  %v39 = vstv %s38
  %vm40 = vcmask 982016
  %v42 = vsel %vm40, %v22, 0
  %44 = vmatprep.subr.mxu0 0.0
  %45 = vmatpush1.msra.mxu0 0.0
  %46 = vmatprep.subr.mxu0 0.0
  %47 = vmatpush1.msra.mxu0 %v37
  %48 = vmatprep.subr.mxu0 0.0
  %49 = vmatpush1.msra.mxu0 %v36
  %50 = vmatprep.subr.mxu0 0.0
  %51 = vmatpush1.msra.mxu0 %v35
  %52 = vmatprep.subr.mxu0 0.0
  %53 = vmatpush1.msra.mxu0 %v34
  %54 = vmatprep.subr.mxu0 0.0
  %55 = vmatpush1.msra.mxu0 %v33
  %56 = vmatprep.subr.mxu0 0.0
  %57 = vmatpush1.msra.mxu0 %v32
  %58 = vmatprep.subr.mxu0 0.0
  %59 = vmatpush1.msra.mxu0 %v31
  %60 = vmatprep.subr.mxu0 0.0
  %61 = vmatpush1.msra.mxu0 %v30
  %62 = vmatprep.subr.mxu0 0.0
  %63 = vmatpush1.msra.mxu0 %v29
  %64 = vmatprep.subr.mxu0 0.0
  %65 = vmatpush1.msra.mxu0 %v28
  %66 = vmatprep.subr.mxu0 0.0
  %67 = vmatpush1.msra.mxu0 %v27
  %68 = vmatprep.subr.mxu0 0.0
  %69 = vmatpush1.msra.mxu0 %v26
  %70 = vmatprep.subr.mxu0 0.0
  %71 = vmatpush1.msra.mxu0 %v25
  %72 = vmatprep.subr.mxu0 0.0
  %73 = vmatpush1.msra.mxu0 %v24
  %74 = vmatprep.subr.mxu0 0.0
  %75 = vmatpush1.msra.mxu0 %v23
  %76 = vmatprep.subr.mxu0 0.0
  %77 = vmatpush2.msra.mxu0 0.0
  %78 = vmatprep.subr.mxu0 0.0
  %79 = vmatpush2.msra.mxu0 0.0
  %80 = vmatprep.subr.mxu0 0.0
  %81 = vmatpush2.msra.mxu0 0.0
  %82 = vmatprep.subr.mxu0 0.0
  %83 = vmatpush2.msra.mxu0 0.0
  %84 = vmatprep.subr.mxu0 0.0
  %85 = vmatpush2.msra.mxu0 0.0
  %86 = vmatprep.subr.mxu0 0.0
  %87 = vmatpush2.msra.mxu0 0.0
  %88 = vmatprep.subr.mxu0 0.0
  %89 = vmatpush2.msra.mxu0 0.0
  %90 = vmatprep.subr.mxu0 0.0
  %91 = vmatpush2.msra.mxu0 0.0
  %92 = vmatprep.subr.mxu0 0.0
  %93 = vmatpush2.msra.mxu0 0.0
  %94 = vmatprep.subr.mxu0 0.0
  %95 = vmatpush2.msra.mxu0 0.0
  %96 = vmatprep.subr.mxu0 0.0
  %97 = vmatpush2.msra.mxu0 0.0
  %98 = vmatprep.subr.mxu0 0.0
  %99 = vmatpush2.msra.mxu0 0.0
  %100 = vmatprep.subr.mxu0 0.0
  %101 = vmatpush2.msra.mxu0 0.0
  %102 = vmatprep.subr.mxu0 0.0
  %103 = vmatpush2.msra.mxu0 0.0
  %104 = vmatprep.subr.mxu0 0.0
  %105 = vmatpush2.msra.mxu0 0.0
  %106 = vmatprep.subr.mxu0 0.0
  %107 = vmatpush2.msra.mxu0 0.0
  %108 = vmatprep.mubr.f32.mxu0 0.0
  %109 = vmatmul.mubr.f32.gmra.mxu0 %v42
  %v110 = vpop.f32.mrf.mxu0
  %v111 = vadd.f32 %v39, %v110
  %v112 = vpop.f32.mrf.mxu0
  %113 = vdwg.mxu0
  %v114 = vmul.f32 %v111, 0.5
  %v115 = vtanh.pop %v114
  %v116 = vadd.f32 %v115, 1.0
  %v117 = vmul.f32 %v116, 0.5
  %v118 = vld [vmem:[%s3] sm:$0x1]
  %v120 = vlaneseq
  %v121 = vshrl.u32 %v120, 7
  %v122 = vsub.s32 0, %v121
  %v123 = vrot.slane %v118, %v122
  %v125 = vmul.f32 %v117, %v123
  %vm126 = vcmask 310272
  %v127 = vsel %vm126, %v125, 0.0
  %128 = vadd.xlane.f32.xlu0 %v127
  %v129 = vpop.xlane.xlu0 %128
  %s130 = sld [smem:[#allocation3]]
  %v131 = vstv %s130
  %v132 = vadd.f32 %v129, %v131
  %v133 = vmul.f32 %v132, 0.5
  %v134 = vtanh.pop %v133
  %v135 = vadd.f32 %v134, 1.0
  %v136 = vmul.f32 %v135, 0.5
  %vm137 = vcmask 7168
  %138 = vst.msk [vmem:[%s5] sm:$0xff] %vm137, %v136
  // Predicated region
  $region22: #{tpu_custom_call.1} parent=0 // pred_check
    _
  $region23: #{tpu_custom_call.1} parent=0 // pred_check_branch
    %140 = sbr.rel (0) target = $region25
  $region24: #{tpu_custom_call.1} parent=0 // pred_region
    _
  $region25: #{tpu_custom_call.1} parent=0 // pred_fallthru
    _
  // Predicated region
  $region26: #{tpu_custom_call.1} parent=0 // pred_check
    _
  $region27: #{tpu_custom_call.1} parent=0 // pred_check_branch
    %142 = sbr.rel (0) target = $region29
  $region28: #{tpu_custom_call.1} parent=0 // pred_region
    _
  $region29: #{tpu_custom_call.1} parent=0 // pred_fallthru
    _

</llo_original>
